<compile_context>
chip_gen: v7x
topology: tpu7x:2x2x1
jax: 0.10.0
libtpu: 0.0.40
codegen_flags: <defaults>
</compile_context>

<pallas_src>
import jax
import jax.numpy as jnp
from jax.experimental import pallas as pl
from jax.experimental.pallas import tpu as pltpu

_SQRT_HALF = 0.7071067811865476
# Abramowitz & Stegun 7.1.26 erf polynomial (max abs error ~1.5e-7, f32-level).
_A1, _A2, _A3, _A4, _A5 = (0.254829592, -0.284496736, 1.421413741,
                           -1.453152027, 1.061405429)
_AS_P = 0.3275911


def _gelu_erf(x):
    """Exact (erf-based) GELU matching torch.nn.GELU() default, fp32 math.

    VALU-lean form: one abs + one select, no sign multiply.  With
    q = erfc(|x|/sqrt(2)):  gelu(x) = 0.5*x*q for x < 0, else x - 0.5*x*q.
    """
    z = x * _SQRT_HALF
    az = jnp.abs(z)
    # approx=True (~2^-12 rel err) would blow the 2e-5 tolerance vs the exact
    # erf reference, so keep the exact reciprocal (still off the VALU divide).
    t = pl.reciprocal(1.0 + _AS_P * az)
    poly = ((((_A5 * t + _A4) * t + _A3) * t + _A2) * t + _A1) * t
    q = poly * jnp.exp(-az * az)          # erfc(|z|), exp rides the EUP slot
    half_xq = 0.5 * x * q
    return jnp.where(x < 0.0, half_xq, x - half_xq)


def _mlp_kernel(x_ref, w1_ref, b1_ref, w2_ref, b2_ref, o_ref, acc_ref):
    """One (row-tile i, hidden-chunk j) step of y = fc2(gelu(fc1(x)))."""
    j = pl.program_id(1)

    @pl.when(j == 0)
    def _init():
        acc_ref[...] = jnp.zeros_like(acc_ref)

    # fc1 chunk: (tm, C_in) @ (C_in, th) on the MXU, fp32 accumulation.
    h = jnp.dot(x_ref[...], w1_ref[...], preferred_element_type=jnp.float32)
    h = h + b1_ref[...].astype(jnp.float32)

    # Exact GELU in fp32 on the VPU/EUP (v5e has no bf16 VPU/EUP).
    h = _gelu_erf(h)

    # Partial fc2: (tm, th) @ (th, C_out) accumulated into fp32 VMEM scratch.
    acc_ref[...] += jnp.dot(h.astype(w2_ref.dtype), w2_ref[...],
                            preferred_element_type=jnp.float32)

    @pl.when(j == pl.num_programs(1) - 1)
    def _finalize():
        # dropout p=0.0 -> identity (omitted).
        o_ref[...] = (acc_ref[...]
                      + b2_ref[...].astype(jnp.float32)).astype(o_ref.dtype)


def _round_up(x, m):
    return (x + m - 1) // m * m


def mlp_forward(x, w1, b1, w2, b2, *, block_rows=512, hidden_block=512,
                compute_dtype=None):
    """y = fc2(gelu(fc1(x))).  x: (..., C_in); weights in (in, out) layout."""
    *lead, c_in = x.shape
    hidden = w1.shape[1]
    c_out = w2.shape[1]
    out_dtype = x.dtype

    b1 = b1.reshape(1, hidden)
    b2 = b2.reshape(1, c_out)

    if compute_dtype is not None:   # e.g. jnp.bfloat16 for MXU peak on v6e/v7x
        x = x.astype(compute_dtype)
        w1 = w1.astype(compute_dtype)
        w2 = w2.astype(compute_dtype)

    # Flatten all leading dims: the whole problem is dense row/lane-aligned matmuls.
    x2 = x.reshape(-1, c_in)
    m = x2.shape[0]
    itemsize = jnp.dtype(x2.dtype).itemsize

    # Row tile: multiple of the sublane packing for the compute dtype, capped at
    # block_rows, and split into >= 2 tiles when possible (v7x 2 TensorCores).
    row_align = {4: 8, 2: 16, 1: 32}.get(itemsize, 8)
    tm = max(row_align, _round_up(min(block_rows, m), row_align))
    if m > row_align:
        tm = min(tm, max(row_align, _round_up((m + 1) // 2, row_align)))

    # Hidden-dim chunk: full H when small, else the largest multiple of 128
    # <= hidden_block that divides H (only a chunk of w1/w2 is VMEM-resident).
    if hidden <= hidden_block:
        th = hidden
    else:
        th = hidden
        cand = (hidden_block // 128) * 128
        while cand >= 128:
            if hidden % cand == 0:
                th = cand
                break
            cand -= 128

    # Pad rows only when needed (rows are independent; sliced off afterwards).
    m_pad = _round_up(m, tm)
    if m_pad != m:
        x2 = jnp.pad(x2, ((0, m_pad - m), (0, 0)))

    grid = (m_pad // tm, hidden // th)

    # VMEM budget: double-buffered in/out blocks + fp32 accumulator + slack.
    in_block_bytes = ((tm * c_in + c_in * th + th * c_out) * itemsize
                      + 8 * th * jnp.dtype(b1.dtype).itemsize
                      + 8 * c_out * jnp.dtype(b2.dtype).itemsize)
    out_block_bytes = tm * c_out * jnp.dtype(out_dtype).itemsize
    scratch_bytes = tm * c_out * 4
    vmem_need = 2 * (in_block_bytes + out_block_bytes) + scratch_bytes + (4 << 20)
    vmem_limit = int(min(max(vmem_need, 16 << 20), 64 << 20))

    flops = 2 * m_pad * c_in * hidden + 2 * m_pad * hidden * c_out
    bytes_accessed = (x2.size * itemsize
                      + w1.size * jnp.dtype(w1.dtype).itemsize
                      + w2.size * jnp.dtype(w2.dtype).itemsize
                      + b1.size * jnp.dtype(b1.dtype).itemsize
                      + b2.size * jnp.dtype(b2.dtype).itemsize
                      + m_pad * c_out * jnp.dtype(out_dtype).itemsize)

    out = pl.pallas_call(
        _mlp_kernel,
        out_shape=jax.ShapeDtypeStruct((m_pad, c_out), out_dtype),
        grid=grid,
        in_specs=[
            pl.BlockSpec((tm, c_in), lambda i, j: (i, 0)),    # x row tile
            pl.BlockSpec((c_in, th), lambda i, j: (0, j)),    # fc1 weight chunk
            pl.BlockSpec((1, th), lambda i, j: (0, j)),       # fc1 bias chunk
            pl.BlockSpec((th, c_out), lambda i, j: (j, 0)),   # fc2 weight chunk
            pl.BlockSpec((1, c_out), lambda i, j: (0, 0)),    # fc2 bias
        ],
        out_specs=pl.BlockSpec((tm, c_out), lambda i, j: (i, 0)),
        scratch_shapes=[pltpu.VMEM((tm, c_out), jnp.float32)],
        compiler_params=pltpu.CompilerParams(
            dimension_semantics=("parallel", "arbitrary"),
            vmem_limit_bytes=vmem_limit),
        cost_estimate=pl.CostEstimate(
            flops=flops,
            transcendentals=m_pad * hidden,   # exp inside GELU
            bytes_accessed=bytes_accessed),
    )(x2, w1, b1, w2, b2)

    if m_pad != m:
        out = out[:m]
    return out.reshape(*lead, c_out)


def mlp_reference(x, w1, b1, w2, b2):
    """Pure-JAX reference mirroring the PyTorch forward pass (exact GELU)."""
    h = jnp.dot(x, w1, precision=jax.lax.Precision.HIGHEST) + b1
    h = 0.5 * h * (1.0 + jax.lax.erf(h * _SQRT_HALF))
    return jnp.dot(h, w2, precision=jax.lax.Precision.HIGHEST) + b2


if __name__ == "__main__":
    # Small ViT-block-like shapes: dim=128, mlp_ratio=4 -> hidden=512.
    B, N = 2, 8
    C_IN, HIDDEN, C_OUT = 128, 512, 128

    key = jax.random.PRNGKey(0)
    kx, kw1, kb1, kw2, kb2 = jax.random.split(key, 5)

    x = jax.random.normal(kx, (B, N, C_IN), dtype=jnp.float32)
    # Deterministic synthetic parameters in (in_features, out_features) layout
    # (equivalent to x @ W.T + b of nn.Linear).
    w1 = jax.random.normal(kw1, (C_IN, HIDDEN), dtype=jnp.float32) * 0.05
    b1 = jax.random.normal(kb1, (1, HIDDEN), dtype=jnp.float32) * 0.05
    w2 = jax.random.normal(kw2, (HIDDEN, C_OUT), dtype=jnp.float32) * 0.02
    b2 = jax.random.normal(kb2, (1, C_OUT), dtype=jnp.float32) * 0.05

    ref = mlp_reference(x, w1, b1, w2, b2)

    # fp32 path: tight tolerance against the exact-erf reference.
    out = jax.block_until_ready(mlp_forward(x, w1, b1, w2, b2))
    assert out.shape == (B, N, C_OUT)
    assert out.dtype == x.dtype
    err = float(jnp.max(jnp.abs(out - ref)))
    assert jnp.allclose(out, ref, atol=3e-5, rtol=3e-5), f"fp32 mismatch: {err}"

    # bf16 MXU-operand path (fp32 GELU + fp32 accumulation, fp32 output).
    out_bf16 = jax.block_until_ready(
        mlp_forward(x, w1, b1, w2, b2, compute_dtype=jnp.bfloat16))
    assert out_bf16.dtype == x.dtype
    err_bf16 = float(jnp.max(jnp.abs(out_bf16 - ref)))
    assert jnp.allclose(out_bf16, ref, atol=3e-2, rtol=3e-2), \
        f"bf16 mismatch: {err_bf16}"

    print("KERNEL_OK")
</pallas_src>

<mosaic_0001>
module attributes {stable_mosaic.version = 11 : i64} {
  func.func @_mlp_kernel(%arg0: i32, %arg1: i32, %arg2: memref<8x128xf32, #tpu.memory_space<vmem>>, %arg3: memref<128x512xf32, #tpu.memory_space<vmem>>, %arg4: memref<1x512xf32, #tpu.memory_space<vmem>>, %arg5: memref<512x128xf32, #tpu.memory_space<vmem>>, %arg6: memref<1x128xf32, #tpu.memory_space<vmem>>, %arg7: memref<8x128xf32, #tpu.memory_space<vmem>>, %arg8: memref<8x128xf32, #tpu.memory_space<vmem>>) attributes {dimension_semantics = [#tpu.dimension_semantics<parallel>, #tpu.dimension_semantics<arbitrary>], iteration_bounds = array<i64: 2, 1>, scalar_prefetch = 0 : i64, scratch_operands = 1 : i64, tpu.core_type = #tpu.core_type<tc>, window_params = [{transform_indices = @transform_0, window_bounds = array<i64: 8, 128>}, {transform_indices = @transform_1, window_bounds = array<i64: 128, 512>}, {transform_indices = @transform_2, window_bounds = array<i64: 1, 512>}, {transform_indices = @transform_3, window_bounds = array<i64: 512, 128>}, {pipeline_mode = #tpu.pipeline_mode<synchronous>, transform_indices = @transform_4, window_bounds = array<i64: 1, 128>}, {transform_indices = @transform_5, window_bounds = array<i64: 8, 128>}]} {
    %c0_i32 = arith.constant 0 : i32
    %0 = arith.cmpi eq, %arg1, %c0_i32 : i32
    %1 = arith.extui %0 : i1 to i32
    %c0_i32_0 = arith.constant 0 : i32
    %2 = arith.cmpi ne, %1, %c0_i32_0 : i32
    scf.if %2 {
      %cst_26 = arith.constant 0.000000e+00 : f32
      %51 = vector.broadcast %cst_26 : f32 to vector<8x128xf32>
      %c0_27 = arith.constant 0 : index
      %c0_28 = arith.constant 0 : index
      %52 = vector.load %arg8[%c0_27, %c0_28] : memref<8x128xf32, #tpu.memory_space<vmem>>, vector<8x128xf32>
      tpu.vector_store %arg8[%c0_27, %c0_28], %51 {strides = array<i32>} : memref<8x128xf32, #tpu.memory_space<vmem>>, vector<8x128xf32>,
    } else {
    }
    %c0 = arith.constant 0 : index
    %c0_1 = arith.constant 0 : index
    %3 = vector.load %arg2[%c0, %c0_1] : memref<8x128xf32, #tpu.memory_space<vmem>>, vector<8x128xf32>
    %c0_2 = arith.constant 0 : index
    %c0_3 = arith.constant 0 : index
    %4 = vector.load %arg3[%c0_2, %c0_3] : memref<128x512xf32, #tpu.memory_space<vmem>>, vector<128x512xf32>
    %cst = arith.constant dense<0.000000e+00> : vector<8x512xf32>
    %5 = tpu.matmul %3, %4, %cst {dimension_numbers = #tpu.dot_dimension_numbers<[1], [0], [0], [1], [0, 0, 1, 1], [], []>} : vector<8x128xf32>, vector<128x512xf32>, vector<8x512xf32> -> vector<8x512xf32>
    %c0_4 = arith.constant 0 : index
    %c0_5 = arith.constant 0 : index
    %6 = vector.load %arg4[%c0_4, %c0_5] : memref<1x512xf32, #tpu.memory_space<vmem>>, vector<1x512xf32>
    %7 = vector.broadcast %6 : vector<1x512xf32> to vector<8x512xf32>
    %8 = arith.addf %5, %7 : vector<8x512xf32>
    %cst_6 = arith.constant 0.707106769 : f32
    %9 = vector.broadcast %cst_6 : f32 to vector<8x512xf32>
    %10 = arith.mulf %8, %9 : vector<8x512xf32>
    %11 = math.absf %10 : vector<8x512xf32>
    %cst_7 = arith.constant 0.327591091 : f32
    %12 = vector.broadcast %cst_7 : f32 to vector<8x512xf32>
    %13 = arith.mulf %12, %11 : vector<8x512xf32>
    %cst_8 = arith.constant 1.000000e+00 : f32
    %14 = vector.broadcast %cst_8 : f32 to vector<8x512xf32>
    %15 = arith.addf %14, %13 : vector<8x512xf32>
    %16 = tpu.reciprocal %15 : vector<8x512xf32> -> vector<8x512xf32>
    %cst_9 = arith.constant 1.06140542 : f32
    %17 = vector.broadcast %cst_9 : f32 to vector<8x512xf32>
    %18 = arith.mulf %17, %16 : vector<8x512xf32>
    %cst_10 = arith.constant -1.45315206 : f32
    %19 = vector.broadcast %cst_10 : f32 to vector<8x512xf32>
    %20 = arith.addf %18, %19 : vector<8x512xf32>
    %21 = arith.mulf %20, %16 : vector<8x512xf32>
    %cst_11 = arith.constant 1.42141378 : f32
    %22 = vector.broadcast %cst_11 : f32 to vector<8x512xf32>
    %23 = arith.addf %21, %22 : vector<8x512xf32>
    %24 = arith.mulf %23, %16 : vector<8x512xf32>
    %cst_12 = arith.constant -0.284496725 : f32
    %25 = vector.broadcast %cst_12 : f32 to vector<8x512xf32>
    %26 = arith.addf %24, %25 : vector<8x512xf32>
    %27 = arith.mulf %26, %16 : vector<8x512xf32>
    %cst_13 = arith.constant 0.254829586 : f32
    %28 = vector.broadcast %cst_13 : f32 to vector<8x512xf32>
    %29 = arith.addf %27, %28 : vector<8x512xf32>
    %30 = arith.mulf %29, %16 : vector<8x512xf32>
    %cst_14 = arith.constant 0.000000e+00 : f32
    %31 = vector.broadcast %cst_14 : f32 to vector<8x512xf32>
    %32 = arith.subf %31, %11 : vector<8x512xf32>
    %33 = arith.mulf %32, %11 : vector<8x512xf32>
    %34 = math.exp %33 : vector<8x512xf32>
    %35 = arith.mulf %30, %34 : vector<8x512xf32>
    %cst_15 = arith.constant 5.000000e-01 : f32
    %36 = vector.broadcast %cst_15 : f32 to vector<8x512xf32>
    %37 = arith.mulf %36, %8 : vector<8x512xf32>
    %38 = arith.mulf %37, %35 : vector<8x512xf32>
    %cst_16 = arith.constant 0.000000e+00 : f32
    %39 = vector.broadcast %cst_16 : f32 to vector<8x512xf32>
    %40 = arith.cmpf olt, %8, %39 : vector<8x512xf32>
    %41 = arith.subf %8, %38 : vector<8x512xf32>
    %42 = arith.select %40, %38, %41 : vector<8x512xi1>, vector<8x512xf32>
    %c0_17 = arith.constant 0 : index
    %c0_18 = arith.constant 0 : index
    %43 = vector.load %arg8[%c0_17, %c0_18] : memref<8x128xf32, #tpu.memory_space<vmem>>, vector<8x128xf32>
    %c0_19 = arith.constant 0 : index
    %c0_20 = arith.constant 0 : index
    %44 = vector.load %arg5[%c0_19, %c0_20] : memref<512x128xf32, #tpu.memory_space<vmem>>, vector<512x128xf32>
    %cst_21 = arith.constant dense<0.000000e+00> : vector<8x128xf32>
    %45 = tpu.matmul %42, %44, %cst_21 {dimension_numbers = #tpu.dot_dimension_numbers<[1], [0], [0], [1], [0, 0, 1, 1], [], []>} : vector<8x512xf32>, vector<512x128xf32>, vector<8x128xf32> -> vector<8x128xf32>
    %46 = arith.addf %43, %45 : vector<8x128xf32>
    %c0_22 = arith.constant 0 : index
    %c0_23 = arith.constant 0 : index
    %47 = vector.load %arg8[%c0_22, %c0_23] : memref<8x128xf32, #tpu.memory_space<vmem>>, vector<8x128xf32>
    tpu.vector_store %arg8[%c0_22, %c0_23], %46 {strides = array<i32>} : memref<8x128xf32, #tpu.memory_space<vmem>>, vector<8x128xf32>,
    %c0_i32_24 = arith.constant 0 : i32
    %48 = arith.cmpi eq, %arg1, %c0_i32_24 : i32
    %49 = arith.extui %48 : i1 to i32
    %c0_i32_25 = arith.constant 0 : i32
    %50 = arith.cmpi ne, %49, %c0_i32_25 : i32
    scf.if %50 {
      %c0_26 = arith.constant 0 : index
      %c0_27 = arith.constant 0 : index
      %51 = vector.load %arg8[%c0_26, %c0_27] : memref<8x128xf32, #tpu.memory_space<vmem>>, vector<8x128xf32>
      %c0_28 = arith.constant 0 : index
      %c0_29 = arith.constant 0 : index
      %52 = vector.load %arg6[%c0_28, %c0_29] : memref<1x128xf32, #tpu.memory_space<vmem>>, vector<1x128xf32>
      %53 = vector.broadcast %52 : vector<1x128xf32> to vector<8x128xf32>
      %54 = arith.addf %51, %53 : vector<8x128xf32>
      %c0_30 = arith.constant 0 : index
      %c0_31 = arith.constant 0 : index
      %55 = vector.load %arg7[%c0_30, %c0_31] : memref<8x128xf32, #tpu.memory_space<vmem>>, vector<8x128xf32>
      tpu.vector_store %arg7[%c0_30, %c0_31], %54 {strides = array<i32>} : memref<8x128xf32, #tpu.memory_space<vmem>>, vector<8x128xf32>,
    } else {
    }
    return
  }
  func.func @transform_0(%arg0: i32, %arg1: i32) -> (i32, i32) {
    %c0_i32 = arith.constant 0 : i32
    %c0_i32_0 = arith.constant 0 : i32
    return %arg0, %c0_i32 : i32, i32
  }
  func.func @transform_1(%arg0: i32, %arg1: i32) -> (i32, i32) {
    %c0_i32 = arith.constant 0 : i32
    %c0_i32_0 = arith.constant 0 : i32
    return %c0_i32, %arg1 : i32, i32
  }
  func.func @transform_2(%arg0: i32, %arg1: i32) -> (i32, i32) {
    %c0_i32 = arith.constant 0 : i32
    %c0_i32_0 = arith.constant 0 : i32
    return %c0_i32, %arg1 : i32, i32
  }
  func.func @transform_3(%arg0: i32, %arg1: i32) -> (i32, i32) {
    %c0_i32 = arith.constant 0 : i32
    %c0_i32_0 = arith.constant 0 : i32
    return %arg1, %c0_i32 : i32, i32
  }
  func.func @transform_4(%arg0: i32, %arg1: i32) -> (i32, i32) {
    %c0_i32 = arith.constant 0 : i32
    %c0_i32_0 = arith.constant 0 : i32
    %c0_i32_1 = arith.constant 0 : i32
    return %c0_i32, %c0_i32_0 : i32, i32
  }
  func.func @transform_5(%arg0: i32, %arg1: i32) -> (i32, i32) {
    %c0_i32 = arith.constant 0 : i32
    %c0_i32_0 = arith.constant 0 : i32
    return %arg0, %c0_i32 : i32, i32
  }
}

</mosaic_0001>

<llo_original>
// kernel: tpu_custom_call.1
$region0: #{tpu_custom_call.1}
  #allocation0 [shape = 'u32[]', space=smem, size = 0x4, offset = 0x4, fixed_abs, tag = 'smem constant byte address 0x4 - core index']
  #allocation1 [shape = 'u32[144,128]{1,0:T(1,128)}', space=vmem, size = 0x12000, scoped, tag = 'internal scratch']
  #allocation2 [shape = 'f32[8,128]{1,0:T(8,128)}', space=vmem, size = 0x1000, scoped, tag = 'scratch operand']
  %s0 = inlined_call_operand.hbm [shape: f32[16,128], index: 0, kind: input, shape index: {}]
  %s1 = inlined_call_operand.hbm [shape: f32[128,512], index: 1, kind: input, shape index: {}]
  %s2 = inlined_call_operand.vmem [shape: f32[1,512], index: 2, kind: input, shape index: {}]
  %s3 = inlined_call_operand.hbm [shape: f32[512,128], index: 3, kind: input, shape index: {}]
  %s4 = inlined_call_operand.vmem [shape: f32[1,128], index: 4, kind: input, shape index: {}]
  %s5 = inlined_call_operand.hbm [shape: f32[16,128], index: 5, kind: output, shape index: {}]
  %s6 = sld [smem:[#allocation0]]
  $region73: #{tpu_custom_call.1} parent=0
    _
  %s8 = ssub.s32 1, %s6
  %s9 = scalar_select 0, %s8, %s6
  $region1: #{tpu_custom_call.1} parent=0
    #allocation3 [shape = 'u8[8192]{0}', space=vmem, size = 0x2000, scoped, tag = 'input window, operand 0']
    #allocation4 [shape = 's32[2]{0}', space=sflag, size = 0x8, scoped, tag = 'scoped memory for tpu_custom_call.1']
    #allocation5 [shape = 's32[2]{0}', space=sflag, size = 0x8, scoped, tag = 'scoped memory for tpu_custom_call.1']
    #allocation6 [shape = 'u8[262144]{0}', space=vmem, size = 0x40000, scoped, tag = 'input window, operand 1, single buffered']
    #allocation7 [shape = 's32[1]{0}', space=sflag, size = 0x4, scoped, tag = 'scoped memory for tpu_custom_call.1']
    #allocation8 [shape = 'u8[262144]{0}', space=vmem, size = 0x40000, scoped, tag = 'input window, operand 3, single buffered']
    #allocation9 [shape = 'u8[8192]{0}', space=vmem, size = 0x2000, scoped, tag = 'output window, operand 0']
    %10 = vsyncpa [#allocation4], 0
    %s11 = scalar_lea.sflag [#allocation4], 1
    %12 = vsyncpa %s11, 0
    %13 = vsyncpa [#allocation7], 0
    %14 = vsyncpa [#allocation5], 0
    %s15 = scalar_lea.sflag [#allocation5], 1
    %16 = vsyncpa %s15, 0
    loop: start=0, step=1, limit=4
    $region2: #{tpu_custom_call.1} parent=1 // loop_pre_header
      _
    $region3: #{tpu_custom_call.1} parent=1 // loop_header
      %s18 = sphi 0, %s22
      %p19 = scmp.ge.s32.totalorder %s18, 4
      %s25 = sphi 0, %s37
      %s26 = sphi 0, %s33
      %s27 = sphi 0, %s25
      %s28 = sphi 0, %s26
      %s29 = sphi 0, %s27
      %s30 = sphi 0, %s28
      %s40 = sphi 0, %s42
      %s43 = sphi 0, %s40
      %s44 = sphi 0, %s43
      %s60 = sphi 0, %s44
      %s66 = sphi 0, %s68
      %s69 = sphi 0, %s66
      %s70 = sphi 0, %s69
      %s86 = sphi 0, %s70
      %s92 = sphi 0, %s94
      %s95 = sphi 0, %s92
      %s96 = sphi 0, %s95
      %s112 = sphi 0, %s96
      %s118 = sphi 0, %s120
      %s121 = sphi 0, %s118
      %s122 = sphi 0, %s121
      %s138 = sphi 0, %s122
      %s142 = sphi 0, %s142
      %s144 = sphi 0, %s142
      %s145 = sphi 0, %s144
      %s159 = sphi 0, %s145
      %s165 = sphi 0, %s167
      %s168 = sphi 0, %s165
      %s169 = sphi 0, %s168
      %s185 = sphi 0, %s169
    $region4: #{tpu_custom_call.1} parent=1 // loop_header_branch
      %21 = sbr.rel (%p19) target = $region8
    $region5: #{tpu_custom_call.1} parent=1 // loop_body
      %s23 = ssub.s32 %s18, 1
      %s24 = ssub.s32 %s18, 2
      %s31 = sadd.s32 1, %s26
      %p32 = scmp.ge.s32.totalorder %s31, 1
      %s33 = scalar_select %p32, 0, %s31
      %s34 = sadd.s32 1, %s25
      %s35 = scalar_select %p32, %s34, %s25
      %p36 = scmp.ge.s32.totalorder %s35, 2
      %s37 = scalar_select %p36, 0, %s35
      %s38 = ssub.s32 %s25, %s37
      %p39 = scmp.eq.s32.totalorder %s38, 0
      %s41 = sadd.s32 %s40, 1
      %s42 = scalar_select %p39, %s40, %s41
      %p45 = pneg %p39
      %p46 = scmp.eq.s32.totalorder %s18, 1
      %p47 = por %p45, %p46
      %p48 = scmp.ne.s32.totalorder %s40, %s43
      %p49 = scmp.eq.s32.totalorder %s18, 0
      %p50 = por %p48, %p49
      %p51 = scmp.ne.s32.totalorder %s40, %s43
      %p52 = scmp.eq.s32.totalorder %s23, 1
      %p53 = por %p51, %p52
      %p54 = scmp.ne.s32.totalorder %s43, %s44
      %p55 = scmp.eq.s32.totalorder %s23, 0
      %p56 = por %p54, %p55
      %p57 = scmp.ne.s32.totalorder %s43, %s44
      %p58 = scmp.eq.s32.totalorder %s24, 1
      %p59 = por %p57, %p58
      %p61 = scmp.ne.s32.totalorder %s44, %s60
      %p62 = scmp.eq.s32.totalorder %s24, 0
      %p63 = por %p61, %p62
      %s64 = ssub.s32 %s26, %s33
      %p65 = scmp.eq.s32.totalorder %s64, 0
      %s67 = sadd.s32 %s66, 1
      %s68 = scalar_select %p65, %s66, %s67
      %p71 = pneg %p65
      %p72 = scmp.eq.s32.totalorder %s18, 1
      %p73 = por %p71, %p72
      %p74 = scmp.ne.s32.totalorder %s66, %s69
      %p75 = scmp.eq.s32.totalorder %s18, 0
      %p76 = por %p74, %p75
      %p77 = scmp.ne.s32.totalorder %s66, %s69
      %p78 = scmp.eq.s32.totalorder %s23, 1
      %p79 = por %p77, %p78
      %p80 = scmp.ne.s32.totalorder %s69, %s70
      %p81 = scmp.eq.s32.totalorder %s23, 0
      %p82 = por %p80, %p81
      %p83 = scmp.ne.s32.totalorder %s69, %s70
      %p84 = scmp.eq.s32.totalorder %s24, 1
      %p85 = por %p83, %p84
      %p87 = scmp.ne.s32.totalorder %s70, %s86
      %p88 = scmp.eq.s32.totalorder %s24, 0
      %p89 = por %p87, %p88
      %s90 = ssub.s32 %s26, %s33
      %p91 = scmp.eq.s32.totalorder %s90, 0
      %s93 = sadd.s32 %s92, 1
      %s94 = scalar_select %p91, %s92, %s93
      %p97 = pneg %p91
      %p98 = scmp.eq.s32.totalorder %s18, 1
      %p99 = por %p97, %p98
      %p100 = scmp.ne.s32.totalorder %s92, %s95
      %p101 = scmp.eq.s32.totalorder %s18, 0
      %p102 = por %p100, %p101
      %p103 = scmp.ne.s32.totalorder %s92, %s95
      %p104 = scmp.eq.s32.totalorder %s23, 1
      %p105 = por %p103, %p104
      %p106 = scmp.ne.s32.totalorder %s95, %s96
      %p107 = scmp.eq.s32.totalorder %s23, 0
      %p108 = por %p106, %p107
      %p109 = scmp.ne.s32.totalorder %s95, %s96
      %p110 = scmp.eq.s32.totalorder %s24, 1
      %p111 = por %p109, %p110
      %p113 = scmp.ne.s32.totalorder %s96, %s112
      %p114 = scmp.eq.s32.totalorder %s24, 0
      %p115 = por %p113, %p114
      %s116 = ssub.s32 %s26, %s33
      %p117 = scmp.eq.s32.totalorder %s116, 0
      %s119 = sadd.s32 %s118, 1
      %s120 = scalar_select %p117, %s118, %s119
      %p123 = pneg %p117
      %p124 = scmp.eq.s32.totalorder %s18, 1
      %p125 = por %p123, %p124
      %p126 = scmp.ne.s32.totalorder %s118, %s121
      %p127 = scmp.eq.s32.totalorder %s18, 0
      %p128 = por %p126, %p127
      %p129 = scmp.ne.s32.totalorder %s118, %s121
      %p130 = scmp.eq.s32.totalorder %s23, 1
      %p131 = por %p129, %p130
      %p132 = scmp.ne.s32.totalorder %s121, %s122
      %p133 = scmp.eq.s32.totalorder %s23, 0
      %p134 = por %p132, %p133
      %p135 = scmp.ne.s32.totalorder %s121, %s122
      %p136 = scmp.eq.s32.totalorder %s24, 1
      %p137 = por %p135, %p136
      %p139 = scmp.ne.s32.totalorder %s122, %s138
      %p140 = scmp.eq.s32.totalorder %s24, 0
      %p141 = por %p139, %p140
      %s143 = sadd.s32 %s142, 1
      %p146 = scmp.eq.s32.totalorder %s18, 1
      %p147 = scmp.ne.s32.totalorder %s142, %s144
      %p148 = scmp.eq.s32.totalorder %s18, 0
      %p149 = por %p147, %p148
      %p150 = scmp.ne.s32.totalorder %s142, %s144
      %p151 = scmp.eq.s32.totalorder %s23, 1
      %p152 = por %p150, %p151
      %p153 = scmp.ne.s32.totalorder %s144, %s145
      %p154 = scmp.eq.s32.totalorder %s23, 0
      %p155 = por %p153, %p154
      %p156 = scmp.ne.s32.totalorder %s144, %s145
      %p157 = scmp.eq.s32.totalorder %s24, 1
      %p158 = por %p156, %p157
      %p160 = scmp.ne.s32.totalorder %s145, %s159
      %p161 = scmp.eq.s32.totalorder %s24, 0
      %p162 = por %p160, %p161
      %s163 = ssub.s32 %s25, %s37
      %p164 = scmp.eq.s32.totalorder %s163, 0
      %s166 = sadd.s32 %s165, 1
      %s167 = scalar_select %p164, %s165, %s166
      %p170 = pneg %p164
      %p171 = scmp.eq.s32.totalorder %s18, 1
      %p172 = por %p170, %p171
      %p173 = scmp.ne.s32.totalorder %s165, %s168
      %p174 = scmp.eq.s32.totalorder %s18, 0
      %p175 = por %p173, %p174
      %p176 = scmp.ne.s32.totalorder %s165, %s168
      %p177 = scmp.eq.s32.totalorder %s23, 1
      %p178 = por %p176, %p177
      %p179 = scmp.ne.s32.totalorder %s168, %s169
      %p180 = scmp.eq.s32.totalorder %s23, 0
      %p181 = por %p179, %p180
      %p182 = scmp.ne.s32.totalorder %s168, %s169
      %p183 = scmp.eq.s32.totalorder %s24, 1
      %p184 = por %p182, %p183
      %p186 = scmp.ne.s32.totalorder %s169, %s185
      %p187 = scmp.eq.s32.totalorder %s24, 0
      %p188 = por %p186, %p187
      %p189 = scmp.le.s32.totalorder 1, %s18
      %p190 = scmp.lt.s32.totalorder %s18, 3
      %p191 = pnand %p189, %p190
      %p192 = pneg %p191
      // Predicated region
      $region9: #{tpu_custom_call.1} parent=5 // pred_check
        _
      $region10: #{tpu_custom_call.1} parent=5 // pred_check_branch
        %194 = sbr.rel (%p191) target = $region12
      $region11: #{tpu_custom_call.1} parent=5 // pred_region
        %s195 = ssub.s32 %s18, 1
        // Predicated region
        $region13: #{tpu_custom_call.1} parent=11 // pred_check
          %p196 = pneg %p82
        $region14: #{tpu_custom_call.1} parent=11 // pred_check_branch
          %198 = sbr.rel (%p196) target = $region16
        $region15: #{tpu_custom_call.1} parent=11 // pred_region
          %s199 = smul.u32 4, %s28
          %s201 = ssub.s32 8192, 8192
          %202 = vsyncadd [#allocation7], %s201
          %s203 = smul.addr %s199, 128
          %s204 = scalar_lea.hbm %s1, %s203
          %s205 = sshll.u32 [#allocation6], 4
          %s206 = int_to_ptr.vmem [resolvable:$true] %s205
          %211 = dma.hbm_to_vmem [thread:$0]  %s204, 8192, %s206, [#allocation7], 512, 512, 32
        $region16: #{tpu_custom_call.1} parent=11 // pred_fallthru
          _
        // Predicated region
        $region17: #{tpu_custom_call.1} parent=11 // pred_check
          %p212 = pneg %p108
        $region18: #{tpu_custom_call.1} parent=11 // pred_check_branch
          %214 = sbr.rel (%p212) target = $region20
        $region19: #{tpu_custom_call.1} parent=11 // pred_region
          %s215 = smul.u32 4, %s28
          %p216 = scmp.lt.s32.totalorder %s215, 3
          %s217 = scalar_select %p216, %s215, 3
          %s218 = scalar_lea.vmem %s2, %s217
          %s219 = smul.u32 4, %s28
        $region20: #{tpu_custom_call.1} parent=11 // pred_fallthru
          _
        // Predicated region
        $region21: #{tpu_custom_call.1} parent=11 // pred_check
          %p220 = pneg %p134
        $region22: #{tpu_custom_call.1} parent=11 // pred_check_branch
          %222 = sbr.rel (%p220) target = $region24
        $region23: #{tpu_custom_call.1} parent=11 // pred_region
          %s223 = smul.u32 64, %s28
          %s225 = ssub.s32 8192, 8192
          %226 = vsyncadd [#allocation7], %s225
          %s227 = smul.addr %s223, 128
          %s228 = scalar_lea.hbm %s3, %s227
          %s229 = sshll.u32 [#allocation8], 4
          %s230 = int_to_ptr.vmem [resolvable:$true] %s229
          %235 = dma.hbm_to_vmem [thread:$0]  %s228, 8192, %s230, [#allocation7], 128, 128, 8
        $region24: #{tpu_custom_call.1} parent=11 // pred_fallthru
          _
        // Predicated region
        $region25: #{tpu_custom_call.1} parent=11 // pred_check
          %p236 = pneg %p155
        $region26: #{tpu_custom_call.1} parent=11 // pred_check_branch
          %238 = sbr.rel (%p236) target = $region28
        $region27: #{tpu_custom_call.1} parent=11 // pred_region
          _
        $region28: #{tpu_custom_call.1} parent=11 // pred_fallthru
          _
      $region12: #{tpu_custom_call.1} parent=5 // pred_fallthru
        _
      %p239 = scmp.lt.s32.totalorder %s18, 2
      // Predicated region
      $region29: #{tpu_custom_call.1} parent=5 // pred_check
        %p240 = pneg %p239
      $region30: #{tpu_custom_call.1} parent=5 // pred_check_branch
        %242 = sbr.rel (%p240) target = $region32
      $region31: #{tpu_custom_call.1} parent=5 // pred_region
        // Predicated region
        $region33: #{tpu_custom_call.1} parent=31 // pred_check
          %p243 = pneg %p50
        $region34: #{tpu_custom_call.1} parent=31 // pred_check_branch
          %245 = sbr.rel (%p243) target = $region36
        $region35: #{tpu_custom_call.1} parent=31 // pred_region
          %s246 = sand.u32 %s40, 1
          %s247 = scalar_lea.sflag [#allocation4], %s246
          %s248 = sand.u32 %s40, 1
          %s249 = smul.addr %s248, 8
          %s250 = scalar_lea.vmem [#allocation3], %s249
          %s252 = ssub.s32 128, 128
          %253 = vsyncadd %s247, %s252
          %s254 = smul.addr %s25, 128
          %s255 = scalar_lea.hbm %s0, %s254
          %s257 = sshll.u32 %s250, 4
          %s258 = int_to_ptr.vmem [resolvable:$true] %s257
          %260 = dma.hbm_to_vmem [thread:$0]  %s255, 128, %s258, %s247
        $region36: #{tpu_custom_call.1} parent=31 // pred_fallthru
          _
      $region32: #{tpu_custom_call.1} parent=5 // pred_fallthru
        _
      %p261 = scmp.le.s32.totalorder 1, %s18
      %p262 = scmp.lt.s32.totalorder %s18, 3
      %p263 = pnand %p261, %p262
      %p264 = pneg %p263
      // Predicated region
      $region37: #{tpu_custom_call.1} parent=5 // pred_check
        _
      $region38: #{tpu_custom_call.1} parent=5 // pred_check_branch
        %266 = sbr.rel (%p263) target = $region40
      $region39: #{tpu_custom_call.1} parent=5 // pred_region
        %s267 = ssub.s32 %s18, 1
        %s268 = sand.u32 %s43, 1
        %s269 = scalar_lea.sflag [#allocation4], %s268
        %s270 = sand.u32 %s43, 1
        %s271 = smul.addr %s270, 8
        %s272 = scalar_lea.vmem [#allocation3], %s271
        // Predicated region
        $region41: #{tpu_custom_call.1} parent=39 // pred_check
          %p273 = pneg %p56
        $region42: #{tpu_custom_call.1} parent=39 // pred_check_branch
          %275 = sbr.rel (%p273) target = $region44
        $region43: #{tpu_custom_call.1} parent=39 // pred_region
          %276 = dma.done %s269, 128
        $region44: #{tpu_custom_call.1} parent=39 // pred_fallthru
          _
        // Predicated region
        $region45: #{tpu_custom_call.1} parent=39 // pred_check
          %p277 = pneg %p82
        $region46: #{tpu_custom_call.1} parent=39 // pred_check_branch
          %279 = sbr.rel (%p277) target = $region48
        $region47: #{tpu_custom_call.1} parent=39 // pred_region
          %280 = dma.done [#allocation7], 8192
        $region48: #{tpu_custom_call.1} parent=39 // pred_fallthru
          _
        // Predicated region
        $region49: #{tpu_custom_call.1} parent=39 // pred_check
          %p281 = pneg %p134
        $region50: #{tpu_custom_call.1} parent=39 // pred_check_branch
          %283 = sbr.rel (%p281) target = $region52
        $region51: #{tpu_custom_call.1} parent=39 // pred_region
          %284 = dma.done [#allocation7], 8192
        $region52: #{tpu_custom_call.1} parent=39 // pred_fallthru
          _
        %s285 = sand.u32 %s43, 1
        %s286 = scalar_lea.sflag [#allocation4], %s285
        %s287 = sand.u32 %s43, 1
        %s288 = smul.addr %s287, 8
        %s289 = scalar_lea.vmem [#allocation3], %s288
        %p290 = pneg %p56
        %p291 = pneg %p53
        %p292 = pneg %p82
        %p293 = pneg %p79
        %s294 = smul.u32 4, %s28
        %p295 = scmp.lt.s32.totalorder %s294, 3
        %s296 = scalar_select %p295, %s294, 3
        %s297 = scalar_lea.vmem %s2, %s296
        %p298 = pneg %p108
        %p299 = pneg %p105
        %p300 = pneg %p134
        %p301 = pneg %p131
        %p302 = pneg %p155
        %p303 = pneg %p152
        %p304 = pneg %p181
        %p305 = pneg %p178
        %s306 = sand.u32 %s168, 1
        %s307 = scalar_lea.sflag [#allocation5], %s306
        %s308 = sand.u32 %s168, 1
        %s309 = smul.addr %s308, 8
        %s310 = scalar_lea.vmem [#allocation9], %s309
        %s311 = smul.u32 4, %s28
        %s312 = smul.u32 4, %s28
        %p313 = scmp.lt.s32.totalorder %s312, 3
        %s314 = scalar_select %p313, %s312, 3
        %s315 = scalar_lea.vmem %s2, %s314
        %s316 = smul.u32 4, %s28
        %s317 = smul.u32 64, %s28
        %p318 = scmp.eq.s32.totalorder %s28, 0
        // Predicated region
        $region53: #{tpu_custom_call.1} parent=39 // pred_check
          %p319 = pneg %p318
        $region54: #{tpu_custom_call.1} parent=39 // pred_check_branch
          %321 = sbr.rel (%p319) target = $region56
        $region55: #{tpu_custom_call.1} parent=39 // pred_region
          %322 = vst [vmem:[#allocation2] sm:$0xff] 0.0
        $region56: #{tpu_custom_call.1} parent=39 // pred_fallthru
          _
        %v323 = vld [vmem:[%s272] sm:$0xff]
        %v324 = vld [vmem:[#allocation6] sm:$0xff]
        %v325 = vld [vmem:[#allocation6 + $0x8] sm:$0xff]
        %v326 = vld [vmem:[#allocation6 + $0x10] sm:$0xff]
        %v327 = vld [vmem:[#allocation6 + $0x18] sm:$0xff]
        %v328 = vld [vmem:[#allocation6 + $0x20] sm:$0xff]
        %v329 = vld [vmem:[#allocation6 + $0x28] sm:$0xff]
        %v330 = vld [vmem:[#allocation6 + $0x30] sm:$0xff]
        %v331 = vld [vmem:[#allocation6 + $0x38] sm:$0xff]
        %v332 = vld [vmem:[#allocation6 + $0x40] sm:$0xff]
        %v333 = vld [vmem:[#allocation6 + $0x48] sm:$0xff]
        %v334 = vld [vmem:[#allocation6 + $0x50] sm:$0xff]
        %v335 = vld [vmem:[#allocation6 + $0x58] sm:$0xff]
        %v336 = vld [vmem:[#allocation6 + $0x60] sm:$0xff]
        %v337 = vld [vmem:[#allocation6 + $0x68] sm:$0xff]
        %v338 = vld [vmem:[#allocation6 + $0x70] sm:$0xff]
        %v339 = vld [vmem:[#allocation6 + $0x78] sm:$0xff]
        %v340 = vld [vmem:[#allocation6 + $0x80] sm:$0xff]
        %v341 = vld [vmem:[#allocation6 + $0x88] sm:$0xff]
        %v342 = vld [vmem:[#allocation6 + $0x90] sm:$0xff]
        %v343 = vld [vmem:[#allocation6 + $0x98] sm:$0xff]
        %v344 = vld [vmem:[#allocation6 + $0xa0] sm:$0xff]
        %v345 = vld [vmem:[#allocation6 + $0xa8] sm:$0xff]
        %v346 = vld [vmem:[#allocation6 + $0xb0] sm:$0xff]
        %v347 = vld [vmem:[#allocation6 + $0xb8] sm:$0xff]
        %v348 = vld [vmem:[#allocation6 + $0xc0] sm:$0xff]
        %v349 = vld [vmem:[#allocation6 + $0xc8] sm:$0xff]
        %v350 = vld [vmem:[#allocation6 + $0xd0] sm:$0xff]
        %v351 = vld [vmem:[#allocation6 + $0xd8] sm:$0xff]
        %v352 = vld [vmem:[#allocation6 + $0xe0] sm:$0xff]
        %v353 = vld [vmem:[#allocation6 + $0xe8] sm:$0xff]
        %v354 = vld [vmem:[#allocation6 + $0xf0] sm:$0xff]
        %v355 = vld [vmem:[#allocation6 + $0xf8] sm:$0xff]
        %v356 = vld [vmem:[#allocation6 + $0x100] sm:$0xff]
        %v357 = vld [vmem:[#allocation6 + $0x108] sm:$0xff]
        %v358 = vld [vmem:[#allocation6 + $0x110] sm:$0xff]
        %v359 = vld [vmem:[#allocation6 + $0x118] sm:$0xff]
        %v360 = vld [vmem:[#allocation6 + $0x120] sm:$0xff]
        %v361 = vld [vmem:[#allocation6 + $0x128] sm:$0xff]
        %v362 = vld [vmem:[#allocation6 + $0x130] sm:$0xff]
        %v363 = vld [vmem:[#allocation6 + $0x138] sm:$0xff]
        %v364 = vld [vmem:[#allocation6 + $0x140] sm:$0xff]
        %v365 = vld [vmem:[#allocation6 + $0x148] sm:$0xff]
        %v366 = vld [vmem:[#allocation6 + $0x150] sm:$0xff]
        %v367 = vld [vmem:[#allocation6 + $0x158] sm:$0xff]
        %v368 = vld [vmem:[#allocation6 + $0x160] sm:$0xff]
        %v369 = vld [vmem:[#allocation6 + $0x168] sm:$0xff]
        %v370 = vld [vmem:[#allocation6 + $0x170] sm:$0xff]
        %v371 = vld [vmem:[#allocation6 + $0x178] sm:$0xff]
        %v372 = vld [vmem:[#allocation6 + $0x180] sm:$0xff]
        %v373 = vld [vmem:[#allocation6 + $0x188] sm:$0xff]
        %v374 = vld [vmem:[#allocation6 + $0x190] sm:$0xff]
        %v375 = vld [vmem:[#allocation6 + $0x198] sm:$0xff]
        %v376 = vld [vmem:[#allocation6 + $0x1a0] sm:$0xff]
        %v377 = vld [vmem:[#allocation6 + $0x1a8] sm:$0xff]
        %v378 = vld [vmem:[#allocation6 + $0x1b0] sm:$0xff]
        %v379 = vld [vmem:[#allocation6 + $0x1b8] sm:$0xff]
        %v380 = vld [vmem:[#allocation6 + $0x1c0] sm:$0xff]
        %v381 = vld [vmem:[#allocation6 + $0x1c8] sm:$0xff]
        %v382 = vld [vmem:[#allocation6 + $0x1d0] sm:$0xff]
        %v383 = vld [vmem:[#allocation6 + $0x1d8] sm:$0xff]
        %v384 = vld [vmem:[#allocation6 + $0x1e0] sm:$0xff]
        %v385 = vld [vmem:[#allocation6 + $0x1e8] sm:$0xff]
        %v386 = vld [vmem:[#allocation6 + $0x1f0] sm:$0xff]
        %v387 = vld [vmem:[#allocation6 + $0x1f8] sm:$0xff]
        %v388 = vld [vmem:[%s315] sm:$0xf]
        %v390 = vlaneseq
        %v391 = vshrl.u32 %v390, 7
        %v392 = vsub.s32 0, %v391
        %v393 = vrot.slane %v388, %v392
        %v394 = vlaneseq
        %v395 = vshrl.u32 %v394, 7
        %v396 = vsub.s32 1, %v395
        %v397 = vrot.slane %v388, %v396
        %v398 = vlaneseq
        %v399 = vshrl.u32 %v398, 7
        %v400 = vsub.s32 2, %v399
        %v401 = vrot.slane %v388, %v400
        %v402 = vlaneseq
        %v403 = vshrl.u32 %v402, 7
        %v404 = vsub.s32 3, %v403
        %v405 = vrot.slane %v388, %v404
        %410 = vmatprep.subr.mxu0 %v325
        %411 = vmatpush1.msra.mxu0 %v324
        %412 = vmatprep.subr.mxu0 %v329
        %413 = vmatpush1.msra.mxu0 %v328
        %414 = vmatprep.subr.mxu0 %v333
        %415 = vmatpush1.msra.mxu0 %v332
        %416 = vmatprep.subr.mxu0 %v337
        %417 = vmatpush1.msra.mxu0 %v336
        %418 = vmatprep.subr.mxu0 %v341
        %419 = vmatpush1.msra.mxu0 %v340
        %420 = vmatprep.subr.mxu0 %v345
        %421 = vmatpush1.msra.mxu0 %v344
        %422 = vmatprep.subr.mxu0 %v349
        %423 = vmatpush1.msra.mxu0 %v348
        %424 = vmatprep.subr.mxu0 %v353
        %425 = vmatpush1.msra.mxu0 %v352
        %426 = vmatprep.subr.mxu0 %v357
        %427 = vmatpush1.msra.mxu0 %v356
        %428 = vmatprep.subr.mxu0 %v361
        %429 = vmatpush1.msra.mxu0 %v360
        %430 = vmatprep.subr.mxu0 %v365
        %431 = vmatpush1.msra.mxu0 %v364
        %432 = vmatprep.subr.mxu0 %v369
        %433 = vmatpush1.msra.mxu0 %v368
        %434 = vmatprep.subr.mxu0 %v373
        %435 = vmatpush1.msra.mxu0 %v372
        %436 = vmatprep.subr.mxu0 %v377
        %437 = vmatpush1.msra.mxu0 %v376
        %438 = vmatprep.subr.mxu0 %v381
        %439 = vmatpush1.msra.mxu0 %v380
        %440 = vmatprep.subr.mxu0 %v385
        %441 = vmatpush1.msra.mxu0 %v384
        %442 = vmatprep.subr.mxu0 0.0
        %443 = vmatpush1.msra.mxu0 0.0
        %444 = vmatprep.subr.mxu0 0.0
        %445 = vmatpush1.msra.mxu0 0.0
        %446 = vmatprep.subr.mxu0 0.0
        %447 = vmatpush1.msra.mxu0 0.0
        %448 = vmatprep.subr.mxu0 0.0
        %449 = vmatpush1.msra.mxu0 0.0
        %450 = vmatprep.subr.mxu0 0.0
        %451 = vmatpush1.msra.mxu0 0.0
        %452 = vmatprep.subr.mxu0 0.0
        %453 = vmatpush1.msra.mxu0 0.0
        %454 = vmatprep.subr.mxu0 0.0
        %455 = vmatpush1.msra.mxu0 0.0
        %456 = vmatprep.subr.mxu0 0.0
        %457 = vmatpush1.msra.mxu0 0.0
        %458 = vmatprep.subr.mxu0 0.0
        %459 = vmatpush1.msra.mxu0 0.0
        %460 = vmatprep.subr.mxu0 0.0
        %461 = vmatpush1.msra.mxu0 0.0
        %462 = vmatprep.subr.mxu0 0.0
        %463 = vmatpush1.msra.mxu0 0.0
        %464 = vmatprep.subr.mxu0 0.0
        %465 = vmatpush1.msra.mxu0 0.0
        %466 = vmatprep.subr.mxu0 0.0
        %467 = vmatpush1.msra.mxu0 0.0
        %468 = vmatprep.subr.mxu0 0.0
        %469 = vmatpush1.msra.mxu0 0.0
        %470 = vmatprep.subr.mxu0 0.0
        %471 = vmatpush1.msra.mxu0 0.0
        %472 = vmatprep.subr.mxu0 0.0
        %473 = vmatpush1.msra.mxu0 0.0
        %474 = vmatprep.mubr.f32.mxu0 0.0
        %475 = vmatmul.mubr.f32.gmra.mrb[0].mxu0 %v323
        %v476 = vpop.f32.mrb[0].mxu0
        %v477 = vadd.f32 %v393, %v476
        %v478 = vpop.f32.mrb[0].mxu0
        %v479 = vadd.f32 %v397, %v478
        %480 = vdwg.mxu0
        %481 = vmatprep.subr.mxu0 %v327
        %482 = vmatpush1.msra.mxu0 %v326
        %483 = vmatprep.subr.mxu0 %v331
        %484 = vmatpush1.msra.mxu0 %v330
        %485 = vmatprep.subr.mxu0 %v335
        %486 = vmatpush1.msra.mxu0 %v334
        %487 = vmatprep.subr.mxu0 %v339
        %488 = vmatpush1.msra.mxu0 %v338
        %489 = vmatprep.subr.mxu0 %v343
        %490 = vmatpush1.msra.mxu0 %v342
        %491 = vmatprep.subr.mxu0 %v347
        %492 = vmatpush1.msra.mxu0 %v346
        %493 = vmatprep.subr.mxu0 %v351
        %494 = vmatpush1.msra.mxu0 %v350
        %495 = vmatprep.subr.mxu0 %v355
        %496 = vmatpush1.msra.mxu0 %v354
        %497 = vmatprep.subr.mxu0 %v359
        %498 = vmatpush1.msra.mxu0 %v358
        %499 = vmatprep.subr.mxu0 %v363
        %500 = vmatpush1.msra.mxu0 %v362
        %501 = vmatprep.subr.mxu0 %v367
        %502 = vmatpush1.msra.mxu0 %v366
        %503 = vmatprep.subr.mxu0 %v371
        %504 = vmatpush1.msra.mxu0 %v370
        %505 = vmatprep.subr.mxu0 %v375
        %506 = vmatpush1.msra.mxu0 %v374
        %507 = vmatprep.subr.mxu0 %v379
        %508 = vmatpush1.msra.mxu0 %v378
        %509 = vmatprep.subr.mxu0 %v383
        %510 = vmatpush1.msra.mxu0 %v382
        %511 = vmatprep.subr.mxu0 %v387
        %512 = vmatpush1.msra.mxu0 %v386
        %513 = vmatprep.subr.mxu0 0.0
        %514 = vmatpush1.msra.mxu0 0.0
        %515 = vmatprep.subr.mxu0 0.0
        %516 = vmatpush1.msra.mxu0 0.0
        %517 = vmatprep.subr.mxu0 0.0
        %518 = vmatpush1.msra.mxu0 0.0
        %519 = vmatprep.subr.mxu0 0.0
        %520 = vmatpush1.msra.mxu0 0.0
        %521 = vmatprep.subr.mxu0 0.0
        %522 = vmatpush1.msra.mxu0 0.0
        %523 = vmatprep.subr.mxu0 0.0
        %524 = vmatpush1.msra.mxu0 0.0
        %525 = vmatprep.subr.mxu0 0.0
        %526 = vmatpush1.msra.mxu0 0.0
        %527 = vmatprep.subr.mxu0 0.0
        %528 = vmatpush1.msra.mxu0 0.0
        %529 = vmatprep.subr.mxu0 0.0
        %530 = vmatpush1.msra.mxu0 0.0
        %531 = vmatprep.subr.mxu0 0.0
        %532 = vmatpush1.msra.mxu0 0.0
        %533 = vmatprep.subr.mxu0 0.0
        %534 = vmatpush1.msra.mxu0 0.0
        %535 = vmatprep.subr.mxu0 0.0
        %536 = vmatpush1.msra.mxu0 0.0
        %537 = vmatprep.subr.mxu0 0.0
        %538 = vmatpush1.msra.mxu0 0.0
        %539 = vmatprep.subr.mxu0 0.0
        %540 = vmatpush1.msra.mxu0 0.0
        %541 = vmatprep.subr.mxu0 0.0
        %542 = vmatpush1.msra.mxu0 0.0
        %543 = vmatprep.subr.mxu0 0.0
        %544 = vmatpush1.msra.mxu0 0.0
        %545 = vmatprep.mubr.f32.mxu0 0.0
        %546 = vmatmul.mubr.f32.gmra.mrb[0].mxu0 %v323
        %v547 = vpop.f32.mrb[0].mxu0
        %v548 = vadd.f32 %v401, %v547
        %v549 = vpop.f32.mrb[0].mxu0
        %v550 = vadd.f32 %v405, %v549
        %551 = vdwg.mxu0
        %v552 = vmul.f32 %v477, 0.70710677
        %v553 = vmul.f32 %v479, 0.70710677
        %v554 = vmul.f32 %v548, 0.70710677
        %v555 = vmul.f32 %v550, 0.70710677
        %v556 = vand.u32 2147483647, %v552
        %v557 = vand.u32 2147483647, %v553
        %v558 = vand.u32 2147483647, %v554
        %v559 = vand.u32 2147483647, %v555
        %v560 = vmul.f32 %v556, 0.3275911
        %v561 = vmul.f32 %v557, 0.3275911
        %v562 = vmul.f32 %v558, 0.3275911
        %v563 = vmul.f32 %v559, 0.3275911
        %v564 = vadd.f32 %v560, 1.0
        %v565 = vadd.f32 %v561, 1.0
        %v566 = vadd.f32 %v562, 1.0
        %v567 = vadd.f32 %v563, 1.0
        %v568 = vrcp.pop %v564
        %v569 = vrcp.pop %v565
        %v570 = vrcp.pop %v566
        %v571 = vrcp.pop %v567
        %v572 = vmul.f32 %v568, 1.0614054
        %v573 = vmul.f32 %v569, 1.0614054
        %v574 = vmul.f32 %v570, 1.0614054
        %v575 = vmul.f32 %v571, 1.0614054
        %v576 = vadd.f32 %v572, -1.4531521
        %v577 = vadd.f32 %v573, -1.4531521
        %v578 = vadd.f32 %v574, -1.4531521
        %v579 = vadd.f32 %v575, -1.4531521
        %v580 = vmul.f32 %v576, %v568
        %v581 = vmul.f32 %v577, %v569
        %v582 = vmul.f32 %v578, %v570
        %v583 = vmul.f32 %v579, %v571
        %v584 = vadd.f32 %v580, 1.4214138
        %v585 = vadd.f32 %v581, 1.4214138
        %v586 = vadd.f32 %v582, 1.4214138
        %v587 = vadd.f32 %v583, 1.4214138
        %v588 = vmul.f32 %v584, %v568
        %v589 = vmul.f32 %v585, %v569
        %v590 = vmul.f32 %v586, %v570
        %v591 = vmul.f32 %v587, %v571
        %v592 = vadd.f32 %v588, -0.28449672
        %v593 = vadd.f32 %v589, -0.28449672
        %v594 = vadd.f32 %v590, -0.28449672
        %v595 = vadd.f32 %v591, -0.28449672
        %v596 = vmul.f32 %v592, %v568
        %v597 = vmul.f32 %v593, %v569
        %v598 = vmul.f32 %v594, %v570
        %v599 = vmul.f32 %v595, %v571
        %v600 = vadd.f32 %v596, 0.2548296
        %v601 = vadd.f32 %v597, 0.2548296
        %v602 = vadd.f32 %v598, 0.2548296
        %v603 = vadd.f32 %v599, 0.2548296
        %v604 = vmul.f32 %v600, %v568
        %v605 = vmul.f32 %v601, %v569
        %v606 = vmul.f32 %v602, %v570
        %v607 = vmul.f32 %v603, %v571
        %v608 = vsub.f32 0.0, %v556
        %v609 = vsub.f32 0.0, %v557
        %v610 = vsub.f32 0.0, %v558
        %v611 = vsub.f32 0.0, %v559
        %v612 = vmul.f32 %v608, %v556
        %v613 = vmul.f32 %v609, %v557
        %v614 = vmul.f32 %v610, %v558
        %v615 = vmul.f32 %v611, %v559
        %v616 = vmul.f32 %v612, 1.442695
        %v617 = vpow.pop %v616
        %v618 = vmul.f32 %v613, 1.442695
        %v619 = vpow.pop %v618
        %v620 = vmul.f32 %v614, 1.442695
        %v621 = vpow.pop %v620
        %v622 = vmul.f32 %v615, 1.442695
        %v623 = vpow.pop %v622
        %v624 = vmul.f32 %v604, %v617
        %v625 = vmul.f32 %v605, %v619
        %v626 = vmul.f32 %v606, %v621
        %v627 = vmul.f32 %v607, %v623
        %v628 = vmul.f32 %v477, 0.5
        %v629 = vmul.f32 %v479, 0.5
        %v630 = vmul.f32 %v548, 0.5
        %v631 = vmul.f32 %v550, 0.5
        %v632 = vmul.f32 %v628, %v624
        %v633 = vmul.f32 %v629, %v625
        %v634 = vmul.f32 %v630, %v626
        %v635 = vmul.f32 %v631, %v627
        %vm636 = vcmp.lt.f32.partialorder %v477, 0.0
        %vm637 = vcmp.lt.f32.partialorder %v479, 0.0
        %vm638 = vcmp.lt.f32.partialorder %v548, 0.0
        %vm639 = vcmp.lt.f32.partialorder %v550, 0.0
        %v640 = vsub.f32 %v477, %v632
        %v641 = vsub.f32 %v479, %v633
        %v642 = vsub.f32 %v548, %v634
        %v643 = vsub.f32 %v550, %v635
        %v644 = vsel %vm636, %v632, %v640
        %v645 = vsel %vm637, %v633, %v641
        %v646 = vsel %vm638, %v634, %v642
        %v647 = vsel %vm639, %v635, %v643
        %v648 = vld [vmem:[#allocation2] sm:$0xff]
        %v649 = vld [vmem:[#allocation8] sm:$0xff]
        %v650 = vld [vmem:[#allocation8 + $0x8] sm:$0xff]
        %v651 = vld [vmem:[#allocation8 + $0x10] sm:$0xff]
        %v652 = vld [vmem:[#allocation8 + $0x18] sm:$0xff]
        %v653 = vld [vmem:[#allocation8 + $0x20] sm:$0xff]
        %v654 = vld [vmem:[#allocation8 + $0x28] sm:$0xff]
        %v655 = vld [vmem:[#allocation8 + $0x30] sm:$0xff]
        %v656 = vld [vmem:[#allocation8 + $0x38] sm:$0xff]
        %v657 = vld [vmem:[#allocation8 + $0x40] sm:$0xff]
        %v658 = vld [vmem:[#allocation8 + $0x48] sm:$0xff]
        %v659 = vld [vmem:[#allocation8 + $0x50] sm:$0xff]
        %v660 = vld [vmem:[#allocation8 + $0x58] sm:$0xff]
        %v661 = vld [vmem:[#allocation8 + $0x60] sm:$0xff]
        %v662 = vld [vmem:[#allocation8 + $0x68] sm:$0xff]
        %v663 = vld [vmem:[#allocation8 + $0x70] sm:$0xff]
        %v664 = vld [vmem:[#allocation8 + $0x78] sm:$0xff]
        %v665 = vld [vmem:[#allocation8 + $0x80] sm:$0xff]
        %v666 = vld [vmem:[#allocation8 + $0x88] sm:$0xff]
        %v667 = vld [vmem:[#allocation8 + $0x90] sm:$0xff]
        %v668 = vld [vmem:[#allocation8 + $0x98] sm:$0xff]
        %v669 = vld [vmem:[#allocation8 + $0xa0] sm:$0xff]
        %v670 = vld [vmem:[#allocation8 + $0xa8] sm:$0xff]
        %v671 = vld [vmem:[#allocation8 + $0xb0] sm:$0xff]
        %v672 = vld [vmem:[#allocation8 + $0xb8] sm:$0xff]
        %v673 = vld [vmem:[#allocation8 + $0xc0] sm:$0xff]
        %v674 = vld [vmem:[#allocation8 + $0xc8] sm:$0xff]
        %v675 = vld [vmem:[#allocation8 + $0xd0] sm:$0xff]
        %v676 = vld [vmem:[#allocation8 + $0xd8] sm:$0xff]
        %v677 = vld [vmem:[#allocation8 + $0xe0] sm:$0xff]
        %v678 = vld [vmem:[#allocation8 + $0xe8] sm:$0xff]
        %v679 = vld [vmem:[#allocation8 + $0xf0] sm:$0xff]
        %v680 = vld [vmem:[#allocation8 + $0xf8] sm:$0xff]
        %v681 = vld [vmem:[#allocation8 + $0x100] sm:$0xff]
        %v682 = vld [vmem:[#allocation8 + $0x108] sm:$0xff]
        %v683 = vld [vmem:[#allocation8 + $0x110] sm:$0xff]
        %v684 = vld [vmem:[#allocation8 + $0x118] sm:$0xff]
        %v685 = vld [vmem:[#allocation8 + $0x120] sm:$0xff]
        %v686 = vld [vmem:[#allocation8 + $0x128] sm:$0xff]
        %v687 = vld [vmem:[#allocation8 + $0x130] sm:$0xff]
        %v688 = vld [vmem:[#allocation8 + $0x138] sm:$0xff]
        %v689 = vld [vmem:[#allocation8 + $0x140] sm:$0xff]
        %v690 = vld [vmem:[#allocation8 + $0x148] sm:$0xff]
        %v691 = vld [vmem:[#allocation8 + $0x150] sm:$0xff]
        %v692 = vld [vmem:[#allocation8 + $0x158] sm:$0xff]
        %v693 = vld [vmem:[#allocation8 + $0x160] sm:$0xff]
        %v694 = vld [vmem:[#allocation8 + $0x168] sm:$0xff]
        %v695 = vld [vmem:[#allocation8 + $0x170] sm:$0xff]
        %v696 = vld [vmem:[#allocation8 + $0x178] sm:$0xff]
        %v697 = vld [vmem:[#allocation8 + $0x180] sm:$0xff]
        %v698 = vld [vmem:[#allocation8 + $0x188] sm:$0xff]
        %v699 = vld [vmem:[#allocation8 + $0x190] sm:$0xff]
        %v700 = vld [vmem:[#allocation8 + $0x198] sm:$0xff]
        %v701 = vld [vmem:[#allocation8 + $0x1a0] sm:$0xff]
        %v702 = vld [vmem:[#allocation8 + $0x1a8] sm:$0xff]
        %v703 = vld [vmem:[#allocation8 + $0x1b0] sm:$0xff]
        %v704 = vld [vmem:[#allocation8 + $0x1b8] sm:$0xff]
        %v705 = vld [vmem:[#allocation8 + $0x1c0] sm:$0xff]
        %v706 = vld [vmem:[#allocation8 + $0x1c8] sm:$0xff]
        %v707 = vld [vmem:[#allocation8 + $0x1d0] sm:$0xff]
        %v708 = vld [vmem:[#allocation8 + $0x1d8] sm:$0xff]
        %v709 = vld [vmem:[#allocation8 + $0x1e0] sm:$0xff]
        %v710 = vld [vmem:[#allocation8 + $0x1e8] sm:$0xff]
        %v711 = vld [vmem:[#allocation8 + $0x1f0] sm:$0xff]
        %v712 = vld [vmem:[#allocation8 + $0x1f8] sm:$0xff]
        %713 = vmatprep.subr.mxu0 0.0
        %714 = vmatpush1.msra.mxu0 %v649
        %715 = vmatprep.subr.mxu0 0.0
        %716 = vmatpush1.msra.mxu0 %v650
        %717 = vmatprep.subr.mxu0 0.0
        %718 = vmatpush1.msra.mxu0 %v651
        %719 = vmatprep.subr.mxu0 0.0
        %720 = vmatpush1.msra.mxu0 %v652
        %721 = vmatprep.subr.mxu0 0.0
        %722 = vmatpush1.msra.mxu0 %v653
        %723 = vmatprep.subr.mxu0 0.0
        %724 = vmatpush1.msra.mxu0 %v654
        %725 = vmatprep.subr.mxu0 0.0
        %726 = vmatpush1.msra.mxu0 %v655
        %727 = vmatprep.subr.mxu0 0.0
        %728 = vmatpush1.msra.mxu0 %v656
        %729 = vmatprep.subr.mxu0 0.0
        %730 = vmatpush1.msra.mxu0 %v657
        %731 = vmatprep.subr.mxu0 0.0
        %732 = vmatpush1.msra.mxu0 %v658
        %733 = vmatprep.subr.mxu0 0.0
        %734 = vmatpush1.msra.mxu0 %v659
        %735 = vmatprep.subr.mxu0 0.0
        %736 = vmatpush1.msra.mxu0 %v660
        %737 = vmatprep.subr.mxu0 0.0
        %738 = vmatpush1.msra.mxu0 %v661
        %739 = vmatprep.subr.mxu0 0.0
        %740 = vmatpush1.msra.mxu0 %v662
        %741 = vmatprep.subr.mxu0 0.0
        %742 = vmatpush1.msra.mxu0 %v663
        %743 = vmatprep.subr.mxu0 0.0
        %744 = vmatpush1.msra.mxu0 %v664
        %745 = vmatprep.subr.mxu0 0.0
        %746 = vmatpush1.msra.mxu0 %v665
        %747 = vmatprep.subr.mxu0 0.0
        %748 = vmatpush1.msra.mxu0 %v666
        %749 = vmatprep.subr.mxu0 0.0
        %750 = vmatpush1.msra.mxu0 %v667
        %751 = vmatprep.subr.mxu0 0.0
        %752 = vmatpush1.msra.mxu0 %v668
        %753 = vmatprep.subr.mxu0 0.0
        %754 = vmatpush1.msra.mxu0 %v669
        %755 = vmatprep.subr.mxu0 0.0
        %756 = vmatpush1.msra.mxu0 %v670
        %757 = vmatprep.subr.mxu0 0.0
        %758 = vmatpush1.msra.mxu0 %v671
        %759 = vmatprep.subr.mxu0 0.0
        %760 = vmatpush1.msra.mxu0 %v672
        %761 = vmatprep.subr.mxu0 0.0
        %762 = vmatpush1.msra.mxu0 %v673
        %763 = vmatprep.subr.mxu0 0.0
        %764 = vmatpush1.msra.mxu0 %v674
        %765 = vmatprep.subr.mxu0 0.0
        %766 = vmatpush1.msra.mxu0 %v675
        %767 = vmatprep.subr.mxu0 0.0
        %768 = vmatpush1.msra.mxu0 %v676
        %769 = vmatprep.subr.mxu0 0.0
        %770 = vmatpush1.msra.mxu0 %v677
        %771 = vmatprep.subr.mxu0 0.0
        %772 = vmatpush1.msra.mxu0 %v678
        %773 = vmatprep.subr.mxu0 0.0
        %774 = vmatpush1.msra.mxu0 %v679
        %775 = vmatprep.subr.mxu0 0.0
        %776 = vmatpush1.msra.mxu0 %v680
        %777 = vmatprep.mubr.f32.mxu0 %v645
        %778 = vmatmul.mubr.f32.gmra.mrb[0].mxu0 %v644
        %v779 = vpop.f32.mrb[0].mxu0
        %v780 = vadd.f32 0.0, %v779
        %v781 = vpop.f32.mrb[0].mxu0
        %782 = vdwg.mxu0
        %783 = vmatprep.subr.mxu0 0.0
        %784 = vmatpush1.msra.mxu0 %v681
        %785 = vmatprep.subr.mxu0 0.0
        %786 = vmatpush1.msra.mxu0 %v682
        %787 = vmatprep.subr.mxu0 0.0
        %788 = vmatpush1.msra.mxu0 %v683
        %789 = vmatprep.subr.mxu0 0.0
        %790 = vmatpush1.msra.mxu0 %v684
        %791 = vmatprep.subr.mxu0 0.0
        %792 = vmatpush1.msra.mxu0 %v685
        %793 = vmatprep.subr.mxu0 0.0
        %794 = vmatpush1.msra.mxu0 %v686
        %795 = vmatprep.subr.mxu0 0.0
        %796 = vmatpush1.msra.mxu0 %v687
        %797 = vmatprep.subr.mxu0 0.0
        %798 = vmatpush1.msra.mxu0 %v688
        %799 = vmatprep.subr.mxu0 0.0
        %800 = vmatpush1.msra.mxu0 %v689
        %801 = vmatprep.subr.mxu0 0.0
        %802 = vmatpush1.msra.mxu0 %v690
        %803 = vmatprep.subr.mxu0 0.0
        %804 = vmatpush1.msra.mxu0 %v691
        %805 = vmatprep.subr.mxu0 0.0
        %806 = vmatpush1.msra.mxu0 %v692
        %807 = vmatprep.subr.mxu0 0.0
        %808 = vmatpush1.msra.mxu0 %v693
        %809 = vmatprep.subr.mxu0 0.0
        %810 = vmatpush1.msra.mxu0 %v694
        %811 = vmatprep.subr.mxu0 0.0
        %812 = vmatpush1.msra.mxu0 %v695
        %813 = vmatprep.subr.mxu0 0.0
        %814 = vmatpush1.msra.mxu0 %v696
        %815 = vmatprep.subr.mxu0 0.0
        %816 = vmatpush1.msra.mxu0 %v697
        %817 = vmatprep.subr.mxu0 0.0
        %818 = vmatpush1.msra.mxu0 %v698
        %819 = vmatprep.subr.mxu0 0.0
        %820 = vmatpush1.msra.mxu0 %v699
        %821 = vmatprep.subr.mxu0 0.0
        %822 = vmatpush1.msra.mxu0 %v700
        %823 = vmatprep.subr.mxu0 0.0
        %824 = vmatpush1.msra.mxu0 %v701
        %825 = vmatprep.subr.mxu0 0.0
        %826 = vmatpush1.msra.mxu0 %v702
        %827 = vmatprep.subr.mxu0 0.0
        %828 = vmatpush1.msra.mxu0 %v703
        %829 = vmatprep.subr.mxu0 0.0
        %830 = vmatpush1.msra.mxu0 %v704
        %831 = vmatprep.subr.mxu0 0.0
        %832 = vmatpush1.msra.mxu0 %v705
        %833 = vmatprep.subr.mxu0 0.0
        %834 = vmatpush1.msra.mxu0 %v706
        %835 = vmatprep.subr.mxu0 0.0
        %836 = vmatpush1.msra.mxu0 %v707
        %837 = vmatprep.subr.mxu0 0.0
        %838 = vmatpush1.msra.mxu0 %v708
        %839 = vmatprep.subr.mxu0 0.0
        %840 = vmatpush1.msra.mxu0 %v709
        %841 = vmatprep.subr.mxu0 0.0
        %842 = vmatpush1.msra.mxu0 %v710
        %843 = vmatprep.subr.mxu0 0.0
        %844 = vmatpush1.msra.mxu0 %v711
        %845 = vmatprep.subr.mxu0 0.0
        %846 = vmatpush1.msra.mxu0 %v712
        %847 = vmatprep.mubr.f32.mxu0 %v647
        %848 = vmatmul.mubr.f32.gmra.mrb[0].mxu0 %v646
        %v849 = vpop.f32.mrb[0].mxu0
        %v850 = vadd.f32 %v780, %v849
        %v851 = vpop.f32.mrb[0].mxu0
        %852 = vdwg.mxu0
        %v853 = vadd.f32 %v648, %v850
        %854 = vst [vmem:[#allocation2] sm:$0xff] %v853
        // Predicated region
        $region57: #{tpu_custom_call.1} parent=39 // pred_check
          %p855 = pneg %p318
        $region58: #{tpu_custom_call.1} parent=39 // pred_check_branch
          %857 = sbr.rel (%p855) target = $region60
        $region59: #{tpu_custom_call.1} parent=39 // pred_region
          %v858 = vld [vmem:[#allocation2] sm:$0xff]
          %v859 = vld [vmem:[%s4] sm:$0x1]
          %v861 = vlaneseq
          %v862 = vshrl.u32 %v861, 7
          %v863 = vsub.s32 0, %v862
          %v864 = vrot.slane %v859, %v863
          %v866 = vadd.f32 %v858, %v864
          %867 = vst [vmem:[%s310] sm:$0xff] %v866
        $region60: #{tpu_custom_call.1} parent=39 // pred_fallthru
          _
        %s868 = sand.u32 %s168, 1
        %s869 = scalar_lea.sflag [#allocation5], %s868
        %s870 = sand.u32 %s168, 1
        %s871 = smul.addr %s870, 8
        %s872 = scalar_lea.vmem [#allocation9], %s871
        // Predicated region
        $region61: #{tpu_custom_call.1} parent=39 // pred_check
          %p873 = pneg %p178
        $region62: #{tpu_custom_call.1} parent=39 // pred_check_branch
          %875 = sbr.rel (%p873) target = $region64
        $region63: #{tpu_custom_call.1} parent=39 // pred_region
          %s877 = ssub.s32 128, 128
          %878 = vsyncadd %s869, %s877
          %s879 = smul.addr %s27, 128
          %s880 = scalar_lea.hbm %s5, %s879
          %s882 = sshll.u32 %s872, 4
          %s883 = int_to_ptr.vmem [resolvable:$true] %s882
          %885 = dma.vmem_to_hbm [thread:$0]  %s883, 128, %s880, %s869
        $region64: #{tpu_custom_call.1} parent=39 // pred_fallthru
          _
      $region40: #{tpu_custom_call.1} parent=5 // pred_fallthru
        _
      %p886 = scmp.le.s32.totalorder 2, %s18
      // Predicated region
      $region65: #{tpu_custom_call.1} parent=5 // pred_check
        %p887 = pneg %p886
      $region66: #{tpu_custom_call.1} parent=5 // pred_check_branch
        %889 = sbr.rel (%p887) target = $region68
      $region67: #{tpu_custom_call.1} parent=5 // pred_region
        %s890 = ssub.s32 %s18, 2
        // Predicated region
        $region69: #{tpu_custom_call.1} parent=67 // pred_check
          %p891 = pneg %p184
        $region70: #{tpu_custom_call.1} parent=67 // pred_check_branch
          %893 = sbr.rel (%p891) target = $region72
        $region71: #{tpu_custom_call.1} parent=67 // pred_region
          %s894 = sand.u32 %s169, 1
          %s895 = scalar_lea.sflag [#allocation5], %s894
          %s896 = sand.u32 %s169, 1
          %s897 = smul.addr %s896, 8
          %s898 = scalar_lea.vmem [#allocation9], %s897
          %899 = dma.done %s895, 128
        $region72: #{tpu_custom_call.1} parent=67 // pred_fallthru
          _
      $region68: #{tpu_custom_call.1} parent=5 // pred_fallthru
        _
    $region6: #{tpu_custom_call.1} parent=1 // loop_footer
      %s22 = sadd.s32 1, %s18
    $region7: #{tpu_custom_call.1} parent=1 // loop_footer_branch
      %17 = sbr.rel target = $region3
    $region8: #{tpu_custom_call.1} parent=1 // loop_exit
      _
    %900 = vsyncpa [#allocation4], 1
    %s901 = scalar_lea.sflag [#allocation4], 1
    %902 = vsyncpa %s901, 1
    %903 = vsyncpa [#allocation7], 1
    %904 = vsyncpa [#allocation5], 1
    %s905 = scalar_lea.sflag [#allocation5], 1
    %906 = vsyncpa %s905, 1

</llo_original>
